<compile_context>
chip_gen: v5e
topology: v5e:2x2
jax: 0.10.0
libtpu: 0.0.40
codegen_flags: <defaults>
</compile_context>

<pallas_src>
import jax
import jax.numpy as jnp
from jax.experimental import pallas as pl
from jax.experimental.pallas import tpu as pltpu

HIDDEN = 128
IN_DIM = 4
OUT_DIM = 2
OUT_PAD = 8  # pad the 2-wide head to a full sublane group


def qnet_kernel(x_ref, w1_ref, b1_ref, w2_ref, b2_ref, w3_ref, b3_ref, o_ref):
    # x_ref: (4, TILE_B) f32, batch on lanes.
    x = x_ref[...]
    w1 = w1_ref[...]                                        # (128, 4) f32

    # ---- layer 1: K=4 contraction as broadcast-FMAs on the VPU ----------
    h1 = w1[:, 0:1] * x[0:1, :]
    for k in range(1, IN_DIM):
        h1 = h1 + w1[:, k:k + 1] * x[k:k + 1, :]
    h1 = jnp.maximum(h1 + b1_ref[...], 0.0)                 # (128, TILE_B) f32

    # ---- layer 2: 128x128 matmul, bf16 operands / f32 accumulation ------
    h2 = jnp.dot(w2_ref[...], h1.astype(jnp.bfloat16),
                 preferred_element_type=jnp.float32)        # (128, TILE_B)
    h2 = jnp.maximum(h2 + b2_ref[...], 0.0)

    # ---- layer 3: (8,128) head (rows 2..7 are zero padding) -------------
    o = jnp.dot(w3_ref[...], h2.astype(jnp.bfloat16),
                preferred_element_type=jnp.float32)         # (8, TILE_B)
    o_ref[...] = o + b3_ref[...]


def qnet_forward(x, params, *, tile_b=256):
    """x: (B, 4) float32.  params: PyTorch-layout w{i}: (out, in) f32, b{i}: (out,) f32."""
    B = x.shape[0]
    tile_b = tile_b if B > 128 else 128
    b_pad = ((B + tile_b - 1) // tile_b) * tile_b

    # Batch-on-lanes layout, padded to a multiple of the batch tile.
    xT = jnp.zeros((IN_DIM, b_pad), jnp.float32).at[:, :B].set(x.T)

    w1 = params["w1"].astype(jnp.float32)                           # (128, 4)
    b1 = params["b1"].astype(jnp.float32).reshape(HIDDEN, 1)
    w2 = params["w2"].astype(jnp.bfloat16)                          # (128, 128)
    b2 = params["b2"].astype(jnp.float32).reshape(HIDDEN, 1)
    w3 = (jnp.zeros((OUT_PAD, HIDDEN), jnp.float32)
          .at[:OUT_DIM].set(params["w3"]).astype(jnp.bfloat16))     # (8, 128)
    b3 = (jnp.zeros((OUT_PAD, 1), jnp.float32)
          .at[:OUT_DIM, 0].set(params["b3"].reshape(-1)))

    resident = lambda a: pl.BlockSpec(a.shape, lambda i: (0,) * a.ndim)

    flops = 2 * b_pad * (IN_DIM * HIDDEN + HIDDEN * HIDDEN + HIDDEN * OUT_PAD)
    bytes_accessed = (xT.size * 4 + w1.size * 4 + w2.size * 2 + w3.size * 2
                      + (b1.size + b2.size + b3.size) * 4 + OUT_PAD * b_pad * 4)

    out = pl.pallas_call(
        qnet_kernel,
        out_shape=jax.ShapeDtypeStruct((OUT_PAD, b_pad), jnp.float32),
        grid_spec=pl.GridSpec(
            grid=(b_pad // tile_b,),
            in_specs=[
                pl.BlockSpec((IN_DIM, tile_b), lambda i: (0, i)),   # x tile (pipelined)
                resident(w1), resident(b1),
                resident(w2), resident(b2),
                resident(w3), resident(b3),
            ],
            out_specs=pl.BlockSpec((OUT_PAD, tile_b), lambda i: (0, i)),
        ),
        compiler_params=pltpu.CompilerParams(
            dimension_semantics=("parallel",)),
        cost_estimate=pl.CostEstimate(
            flops=flops, transcendentals=0, bytes_accessed=bytes_accessed),
    )(xT, w1, b1, w2, b2, w3, b3)

    return out[:OUT_DIM, :B].T                                      # (B, 2)


def init_qnet_params(key):
    """PyTorch nn.Linear default init: U[-1/sqrt(fan_in), +1/sqrt(fan_in)], (out, in) weights."""
    dims = [(IN_DIM, HIDDEN), (HIDDEN, HIDDEN), (HIDDEN, OUT_DIM)]   # (fan_in, fan_out)
    params = {}
    keys = jax.random.split(key, 2 * len(dims))
    for i, (fan_in, fan_out) in enumerate(dims):
        bound = fan_in ** -0.5
        params[f"w{i + 1}"] = jax.random.uniform(
            keys[2 * i], (fan_out, fan_in), jnp.float32, -bound, bound)
        params[f"b{i + 1}"] = jax.random.uniform(
            keys[2 * i + 1], (fan_out,), jnp.float32, -bound, bound)
    return params


def qnet_reference(x, params):
    h1 = jnp.maximum(x @ params["w1"].T + params["b1"], 0.0)
    h2 = jnp.maximum(h1 @ params["w2"].T + params["b2"], 0.0)
    return h2 @ params["w3"].T + params["b3"]


# TODO(synk): sample_action's epsilon-greedy branch is host-side Python RNG /
# control flow, not a tensor op; it stays outside the kernel (argmax over the
# returned Q-values).

if __name__ == "__main__":
    key = jax.random.PRNGKey(0)
    pkey, xkey = jax.random.split(key)

    params = init_qnet_params(pkey)
    # Small batch of CartPole observations: (B, 4)
    x = jax.random.normal(xkey, (8, IN_DIM), dtype=jnp.float32)

    out = qnet_forward(x, params)
    out = jax.block_until_ready(out)

    ref = qnet_reference(x, params)
    assert out.shape == (8, OUT_DIM), out.shape
    # bf16 matmul operands (f32 accumulation) => looser tolerance vs f32 ref.
    assert jnp.allclose(out, ref, atol=5e-2, rtol=5e-2), (
        "mismatch vs JAX reference: max abs diff "
        f"{float(jnp.max(jnp.abs(out - ref)))}")

    print("KERNEL_OK")
</pallas_src>

<mosaic_0001>
module attributes {stable_mosaic.version = 11 : i64} {
  func.func @qnet_kernel(%arg0: i32, %arg1: memref<4x128xf32, #tpu.memory_space<vmem>>, %arg2: memref<128x4xf32, #tpu.memory_space<vmem>>, %arg3: memref<128x1xf32, #tpu.memory_space<vmem>>, %arg4: memref<128x128xbf16, #tpu.memory_space<vmem>>, %arg5: memref<128x1xf32, #tpu.memory_space<vmem>>, %arg6: memref<8x128xbf16, #tpu.memory_space<vmem>>, %arg7: memref<8x1xf32, #tpu.memory_space<vmem>>, %arg8: memref<8x128xf32, #tpu.memory_space<vmem>>) attributes {dimension_semantics = [#tpu.dimension_semantics<parallel>], iteration_bounds = array<i64: 1>, scalar_prefetch = 0 : i64, scratch_operands = 0 : i64, tpu.core_type = #tpu.core_type<tc>, window_params = [{transform_indices = @transform_0, window_bounds = array<i64: 4, 128>}, {pipeline_mode = #tpu.pipeline_mode<synchronous>, transform_indices = @transform_1, window_bounds = array<i64: 128, 4>}, {pipeline_mode = #tpu.pipeline_mode<synchronous>, transform_indices = @transform_2, window_bounds = array<i64: 128, 1>}, {pipeline_mode = #tpu.pipeline_mode<synchronous>, transform_indices = @transform_3, window_bounds = array<i64: 128, 128>}, {pipeline_mode = #tpu.pipeline_mode<synchronous>, transform_indices = @transform_4, window_bounds = array<i64: 128, 1>}, {pipeline_mode = #tpu.pipeline_mode<synchronous>, transform_indices = @transform_5, window_bounds = array<i64: 8, 128>}, {pipeline_mode = #tpu.pipeline_mode<synchronous>, transform_indices = @transform_6, window_bounds = array<i64: 8, 1>}, {transform_indices = @transform_7, window_bounds = array<i64: 8, 128>}]} {
    %c0 = arith.constant 0 : index
    %c0_0 = arith.constant 0 : index
    %0 = vector.load %arg1[%c0, %c0_0] : memref<4x128xf32, #tpu.memory_space<vmem>>, vector<4x128xf32>
    %c0_1 = arith.constant 0 : index
    %c0_2 = arith.constant 0 : index
    %1 = vector.load %arg2[%c0_1, %c0_2] : memref<128x4xf32, #tpu.memory_space<vmem>>, vector<128x4xf32>
    %2 = vector.extract_strided_slice %1 {offsets = [0, 0], sizes = [128, 1], strides = [1, 1]} : vector<128x4xf32> to vector<128x1xf32>
    %3 = vector.extract_strided_slice %0 {offsets = [0, 0], sizes = [1, 128], strides = [1, 1]} : vector<4x128xf32> to vector<1x128xf32>
    %4 = vector.broadcast %2 : vector<128x1xf32> to vector<128x128xf32>
    %5 = vector.broadcast %3 : vector<1x128xf32> to vector<128x128xf32>
    %6 = arith.mulf %4, %5 : vector<128x128xf32>
    %7 = vector.extract_strided_slice %1 {offsets = [0, 1], sizes = [128, 1], strides = [1, 1]} : vector<128x4xf32> to vector<128x1xf32>
    %8 = vector.extract_strided_slice %0 {offsets = [1, 0], sizes = [1, 128], strides = [1, 1]} : vector<4x128xf32> to vector<1x128xf32>
    %9 = vector.broadcast %7 : vector<128x1xf32> to vector<128x128xf32>
    %10 = vector.broadcast %8 : vector<1x128xf32> to vector<128x128xf32>
    %11 = arith.mulf %9, %10 : vector<128x128xf32>
    %12 = arith.addf %6, %11 : vector<128x128xf32>
    %13 = vector.extract_strided_slice %1 {offsets = [0, 2], sizes = [128, 1], strides = [1, 1]} : vector<128x4xf32> to vector<128x1xf32>
    %14 = vector.extract_strided_slice %0 {offsets = [2, 0], sizes = [1, 128], strides = [1, 1]} : vector<4x128xf32> to vector<1x128xf32>
    %15 = vector.broadcast %13 : vector<128x1xf32> to vector<128x128xf32>
    %16 = vector.broadcast %14 : vector<1x128xf32> to vector<128x128xf32>
    %17 = arith.mulf %15, %16 : vector<128x128xf32>
    %18 = arith.addf %12, %17 : vector<128x128xf32>
    %19 = vector.extract_strided_slice %1 {offsets = [0, 3], sizes = [128, 1], strides = [1, 1]} : vector<128x4xf32> to vector<128x1xf32>
    %20 = vector.extract_strided_slice %0 {offsets = [3, 0], sizes = [1, 128], strides = [1, 1]} : vector<4x128xf32> to vector<1x128xf32>
    %21 = vector.broadcast %19 : vector<128x1xf32> to vector<128x128xf32>
    %22 = vector.broadcast %20 : vector<1x128xf32> to vector<128x128xf32>
    %23 = arith.mulf %21, %22 : vector<128x128xf32>
    %24 = arith.addf %18, %23 : vector<128x128xf32>
    %c0_3 = arith.constant 0 : index
    %c0_4 = arith.constant 0 : index
    %25 = vector.load %arg3[%c0_3, %c0_4] : memref<128x1xf32, #tpu.memory_space<vmem>>, vector<128x1xf32>
    %26 = vector.broadcast %25 : vector<128x1xf32> to vector<128x128xf32>
    %27 = arith.addf %24, %26 : vector<128x128xf32>
    %cst = arith.constant 0.000000e+00 : f32
    %28 = vector.broadcast %cst : f32 to vector<128x128xf32>
    %29 = arith.maximumf %27, %28 : vector<128x128xf32>
    %c0_5 = arith.constant 0 : index
    %c0_6 = arith.constant 0 : index
    %30 = vector.load %arg4[%c0_5, %c0_6] : memref<128x128xbf16, #tpu.memory_space<vmem>>, vector<128x128xbf16>
    %31 = arith.truncf %29 : vector<128x128xf32> to vector<128x128xbf16>
    %cst_7 = arith.constant dense<0.000000e+00> : vector<128x128xf32>
    %32 = tpu.matmul %30, %31, %cst_7 {dimension_numbers = #tpu.dot_dimension_numbers<[1], [0], [0], [1], [0, 0, 1, 1], [], []>} : vector<128x128xbf16>, vector<128x128xbf16>, vector<128x128xf32> -> vector<128x128xf32>
    %c0_8 = arith.constant 0 : index
    %c0_9 = arith.constant 0 : index
    %33 = vector.load %arg5[%c0_8, %c0_9] : memref<128x1xf32, #tpu.memory_space<vmem>>, vector<128x1xf32>
    %34 = vector.broadcast %33 : vector<128x1xf32> to vector<128x128xf32>
    %35 = arith.addf %32, %34 : vector<128x128xf32>
    %cst_10 = arith.constant 0.000000e+00 : f32
    %36 = vector.broadcast %cst_10 : f32 to vector<128x128xf32>
    %37 = arith.maximumf %35, %36 : vector<128x128xf32>
    %c0_11 = arith.constant 0 : index
    %c0_12 = arith.constant 0 : index
    %38 = vector.load %arg6[%c0_11, %c0_12] : memref<8x128xbf16, #tpu.memory_space<vmem>>, vector<8x128xbf16>
    %39 = arith.truncf %37 : vector<128x128xf32> to vector<128x128xbf16>
    %cst_13 = arith.constant dense<0.000000e+00> : vector<8x128xf32>
    %40 = tpu.matmul %38, %39, %cst_13 {dimension_numbers = #tpu.dot_dimension_numbers<[1], [0], [0], [1], [0, 0, 1, 1], [], []>} : vector<8x128xbf16>, vector<128x128xbf16>, vector<8x128xf32> -> vector<8x128xf32>
    %c0_14 = arith.constant 0 : index
    %c0_15 = arith.constant 0 : index
    %41 = vector.load %arg7[%c0_14, %c0_15] : memref<8x1xf32, #tpu.memory_space<vmem>>, vector<8x1xf32>
    %42 = vector.broadcast %41 : vector<8x1xf32> to vector<8x128xf32>
    %43 = arith.addf %40, %42 : vector<8x128xf32>
    %c0_16 = arith.constant 0 : index
    %c0_17 = arith.constant 0 : index
    %44 = vector.load %arg8[%c0_16, %c0_17] : memref<8x128xf32, #tpu.memory_space<vmem>>, vector<8x128xf32>
    tpu.vector_store %arg8[%c0_16, %c0_17], %43 {strides = array<i32>} : memref<8x128xf32, #tpu.memory_space<vmem>>, vector<8x128xf32>,
    return
  }
  func.func @transform_0(%arg0: i32) -> (i32, i32) {
    %c0_i32 = arith.constant 0 : i32
    %c0_i32_0 = arith.constant 0 : i32
    return %c0_i32, %arg0 : i32, i32
  }
  func.func @transform_1(%arg0: i32) -> (i32, i32) {
    %c0_i32 = arith.constant 0 : i32
    %c0_i32_0 = arith.constant 0 : i32
    %c0_i32_1 = arith.constant 0 : i32
    return %c0_i32, %c0_i32_0 : i32, i32
  }
  func.func @transform_2(%arg0: i32) -> (i32, i32) {
    %c0_i32 = arith.constant 0 : i32
    %c0_i32_0 = arith.constant 0 : i32
    %c0_i32_1 = arith.constant 0 : i32
    return %c0_i32, %c0_i32_0 : i32, i32
  }
  func.func @transform_3(%arg0: i32) -> (i32, i32) {
    %c0_i32 = arith.constant 0 : i32
    %c0_i32_0 = arith.constant 0 : i32
    %c0_i32_1 = arith.constant 0 : i32
    return %c0_i32, %c0_i32_0 : i32, i32
  }
  func.func @transform_4(%arg0: i32) -> (i32, i32) {
    %c0_i32 = arith.constant 0 : i32
    %c0_i32_0 = arith.constant 0 : i32
    %c0_i32_1 = arith.constant 0 : i32
    return %c0_i32, %c0_i32_0 : i32, i32
  }
  func.func @transform_5(%arg0: i32) -> (i32, i32) {
    %c0_i32 = arith.constant 0 : i32
    %c0_i32_0 = arith.constant 0 : i32
    %c0_i32_1 = arith.constant 0 : i32
    return %c0_i32, %c0_i32_0 : i32, i32
  }
  func.func @transform_6(%arg0: i32) -> (i32, i32) {
    %c0_i32 = arith.constant 0 : i32
    %c0_i32_0 = arith.constant 0 : i32
    %c0_i32_1 = arith.constant 0 : i32
    return %c0_i32, %c0_i32_0 : i32, i32
  }
  func.func @transform_7(%arg0: i32) -> (i32, i32) {
    %c0_i32 = arith.constant 0 : i32
    %c0_i32_0 = arith.constant 0 : i32
    return %c0_i32, %arg0 : i32, i32
  }
}

</mosaic_0001>

<llo_original>
// kernel: tpu_custom_call.1
$region0: #{tpu_custom_call.1}
  #allocation0 [shape = 'u32[]', space=smem, size = 0x4, offset = 0x4, fixed_abs, tag = 'smem constant byte address 0x4 - core index']
  #allocation1 [shape = 'u32[72,128]{1,0:T(1,128)}', space=vmem, size = 0x9000, scoped, tag = 'internal scratch']
  %s0 = inlined_call_operand.vmem [shape: f32[4,128], index: 0, kind: input, shape index: {}]
  %s1 = inlined_call_operand.vmem [shape: f32[128,4], index: 1, kind: input, shape index: {}]
  %s2 = inlined_call_operand.vmem [shape: f32[128,1], index: 2, kind: input, shape index: {}]
  %s3 = inlined_call_operand.vmem [shape: bf16[128,128], index: 3, kind: input, shape index: {}]
  %s4 = inlined_call_operand.vmem [shape: f32[128,1], index: 4, kind: input, shape index: {}]
  %s5 = inlined_call_operand.vmem [shape: bf16[8,128], index: 5, kind: input, shape index: {}]
  %s6 = inlined_call_operand.vmem [shape: f32[8,1], index: 6, kind: input, shape index: {}]
  %s7 = inlined_call_operand.hbm [shape: f32[8,128], index: 7, kind: output, shape index: {}]
  %s8 = sld [smem:[#allocation0]]
  $region38: #{tpu_custom_call.1} parent=0
    _
  %s10 = ssub.s32 1, %s8
  %s11 = scalar_select 0, %s10, %s8
  $region1: #{tpu_custom_call.1} parent=0
    #allocation2 [shape = 'u8[4096]{0}', space=vmem, size = 0x1000, scoped, tag = 'output window, operand 0, single buffered']
    #allocation3 [shape = 's32[1]{0}', space=sflag, size = 0x4, scoped, tag = 'scoped memory for tpu_custom_call.1']
    %12 = vsyncpa [#allocation3], 0
    // Predicated region
    $region2: #{tpu_custom_call.1} parent=1 // pred_check
      _
    $region3: #{tpu_custom_call.1} parent=1 // pred_check_branch
      %14 = sbr.rel (0) target = $region5
    $region4: #{tpu_custom_call.1} parent=1 // pred_region
      _
    $region5: #{tpu_custom_call.1} parent=1 // pred_fallthru
      _
    // Predicated region
    $region6: #{tpu_custom_call.1} parent=1 // pred_check
      _
    $region7: #{tpu_custom_call.1} parent=1 // pred_check_branch
      %16 = sbr.rel (0) target = $region9
    $region8: #{tpu_custom_call.1} parent=1 // pred_region
      _
    $region9: #{tpu_custom_call.1} parent=1 // pred_fallthru
      _
    // Predicated region
    $region10: #{tpu_custom_call.1} parent=1 // pred_check
      _
    $region11: #{tpu_custom_call.1} parent=1 // pred_check_branch
      %18 = sbr.rel (0) target = $region13
    $region12: #{tpu_custom_call.1} parent=1 // pred_region
      _
    $region13: #{tpu_custom_call.1} parent=1 // pred_fallthru
      _
    // Predicated region
    $region14: #{tpu_custom_call.1} parent=1 // pred_check
      _
    $region15: #{tpu_custom_call.1} parent=1 // pred_check_branch
      %20 = sbr.rel (0) target = $region17
    $region16: #{tpu_custom_call.1} parent=1 // pred_region
      _
    $region17: #{tpu_custom_call.1} parent=1 // pred_fallthru
      _
    // Predicated region
    $region18: #{tpu_custom_call.1} parent=1 // pred_check
      _
    $region19: #{tpu_custom_call.1} parent=1 // pred_check_branch
      %22 = sbr.rel (0) target = $region21
    $region20: #{tpu_custom_call.1} parent=1 // pred_region
      _
    $region21: #{tpu_custom_call.1} parent=1 // pred_fallthru
      _
    // Predicated region
    $region22: #{tpu_custom_call.1} parent=1 // pred_check
      _
    $region23: #{tpu_custom_call.1} parent=1 // pred_check_branch
      %24 = sbr.rel (0) target = $region25
    $region24: #{tpu_custom_call.1} parent=1 // pred_region
      _
    $region25: #{tpu_custom_call.1} parent=1 // pred_fallthru
      _
    // Predicated region
    $region26: #{tpu_custom_call.1} parent=1 // pred_check
      _
    $region27: #{tpu_custom_call.1} parent=1 // pred_check_branch
      %26 = sbr.rel (0) target = $region29
    $region28: #{tpu_custom_call.1} parent=1 // pred_region
      _
    $region29: #{tpu_custom_call.1} parent=1 // pred_fallthru
      _
    %v27 = vld [vmem:[%s0] sm:$0xf]
    %v28 = vld [vmem:[%s1] sm:$0xff]
    %v29 = vld [vmem:[%s1 + $0x8] sm:$0xff]
    %v30 = vld [vmem:[%s1 + $0x10] sm:$0xff]
    %v31 = vld [vmem:[%s1 + $0x18] sm:$0xff]
    %v32 = vld [vmem:[%s1 + $0x20] sm:$0xff]
    %v33 = vld [vmem:[%s1 + $0x28] sm:$0xff]
    %v34 = vld [vmem:[%s1 + $0x30] sm:$0xff]
    %v35 = vld [vmem:[%s1 + $0x38] sm:$0xff]
    %v36 = vld [vmem:[%s1 + $0x40] sm:$0xff]
    %v37 = vld [vmem:[%s1 + $0x48] sm:$0xff]
    %v38 = vld [vmem:[%s1 + $0x50] sm:$0xff]
    %v39 = vld [vmem:[%s1 + $0x58] sm:$0xff]
    %v40 = vld [vmem:[%s1 + $0x60] sm:$0xff]
    %v41 = vld [vmem:[%s1 + $0x68] sm:$0xff]
    %v42 = vld [vmem:[%s1 + $0x70] sm:$0xff]
    %v43 = vld [vmem:[%s1 + $0x78] sm:$0xff]
    %45 = vset.pattern.permute.xlu0 0
    %46 = vperm.xlu0 %45, %v28
    %v47 = vpop.permute.xlu0 %46
    %50 = vset.pattern.permute.xlu0 0
    %51 = vperm.xlu0 %50, %v29
    %v52 = vpop.permute.xlu0 %51
    %55 = vset.pattern.permute.xlu0 0
    %56 = vperm.xlu0 %55, %v30
    %v57 = vpop.permute.xlu0 %56
    %60 = vset.pattern.permute.xlu0 0
    %61 = vperm.xlu0 %60, %v31
    %v62 = vpop.permute.xlu0 %61
    %65 = vset.pattern.permute.xlu0 0
    %66 = vperm.xlu0 %65, %v32
    %v67 = vpop.permute.xlu0 %66
    %70 = vset.pattern.permute.xlu0 0
    %71 = vperm.xlu0 %70, %v33
    %v72 = vpop.permute.xlu0 %71
    %75 = vset.pattern.permute.xlu0 0
    %76 = vperm.xlu0 %75, %v34
    %v77 = vpop.permute.xlu0 %76
    %80 = vset.pattern.permute.xlu0 0
    %81 = vperm.xlu0 %80, %v35
    %v82 = vpop.permute.xlu0 %81
    %85 = vset.pattern.permute.xlu0 0
    %86 = vperm.xlu0 %85, %v36
    %v87 = vpop.permute.xlu0 %86
    %90 = vset.pattern.permute.xlu0 0
    %91 = vperm.xlu0 %90, %v37
    %v92 = vpop.permute.xlu0 %91
    %95 = vset.pattern.permute.xlu0 0
    %96 = vperm.xlu0 %95, %v38
    %v97 = vpop.permute.xlu0 %96
    %100 = vset.pattern.permute.xlu0 0
    %101 = vperm.xlu0 %100, %v39
    %v102 = vpop.permute.xlu0 %101
    %105 = vset.pattern.permute.xlu0 0
    %106 = vperm.xlu0 %105, %v40
    %v107 = vpop.permute.xlu0 %106
    %110 = vset.pattern.permute.xlu0 0
    %111 = vperm.xlu0 %110, %v41
    %v112 = vpop.permute.xlu0 %111
    %115 = vset.pattern.permute.xlu0 0
    %116 = vperm.xlu0 %115, %v42
    %v117 = vpop.permute.xlu0 %116
    %120 = vset.pattern.permute.xlu0 0
    %121 = vperm.xlu0 %120, %v43
    %v122 = vpop.permute.xlu0 %121
    %v124 = vperm.slane %v27, 0
    %v125 = vmul.f32 %v47, %v124
    %v126 = vmul.f32 %v52, %v124
    %v127 = vmul.f32 %v57, %v124
    %v128 = vmul.f32 %v62, %v124
    %v129 = vmul.f32 %v67, %v124
    %v130 = vmul.f32 %v72, %v124
    %v131 = vmul.f32 %v77, %v124
    %v132 = vmul.f32 %v82, %v124
    %v133 = vmul.f32 %v87, %v124
    %v134 = vmul.f32 %v92, %v124
    %v135 = vmul.f32 %v97, %v124
    %v136 = vmul.f32 %v102, %v124
    %v137 = vmul.f32 %v107, %v124
    %v138 = vmul.f32 %v112, %v124
    %v139 = vmul.f32 %v117, %v124
    %v140 = vmul.f32 %v122, %v124
    %141 = vset.pattern.permute.xlu0 1
    %142 = vperm.xlu0 %141, %v28
    %v143 = vpop.permute.xlu0 %142
    %145 = vset.pattern.permute.xlu0 1
    %146 = vperm.xlu0 %145, %v29
    %v147 = vpop.permute.xlu0 %146
    %149 = vset.pattern.permute.xlu0 1
    %150 = vperm.xlu0 %149, %v30
    %v151 = vpop.permute.xlu0 %150
    %153 = vset.pattern.permute.xlu0 1
    %154 = vperm.xlu0 %153, %v31
    %v155 = vpop.permute.xlu0 %154
    %157 = vset.pattern.permute.xlu0 1
    %158 = vperm.xlu0 %157, %v32
    %v159 = vpop.permute.xlu0 %158
    %161 = vset.pattern.permute.xlu0 1
    %162 = vperm.xlu0 %161, %v33
    %v163 = vpop.permute.xlu0 %162
    %165 = vset.pattern.permute.xlu0 1
    %166 = vperm.xlu0 %165, %v34
    %v167 = vpop.permute.xlu0 %166
    %169 = vset.pattern.permute.xlu0 1
    %170 = vperm.xlu0 %169, %v35
    %v171 = vpop.permute.xlu0 %170
    %173 = vset.pattern.permute.xlu0 1
    %174 = vperm.xlu0 %173, %v36
    %v175 = vpop.permute.xlu0 %174
    %177 = vset.pattern.permute.xlu0 1
    %178 = vperm.xlu0 %177, %v37
    %v179 = vpop.permute.xlu0 %178
    %181 = vset.pattern.permute.xlu0 1
    %182 = vperm.xlu0 %181, %v38
    %v183 = vpop.permute.xlu0 %182
    %185 = vset.pattern.permute.xlu0 1
    %186 = vperm.xlu0 %185, %v39
    %v187 = vpop.permute.xlu0 %186
    %189 = vset.pattern.permute.xlu0 1
    %190 = vperm.xlu0 %189, %v40
    %v191 = vpop.permute.xlu0 %190
    %193 = vset.pattern.permute.xlu0 1
    %194 = vperm.xlu0 %193, %v41
    %v195 = vpop.permute.xlu0 %194
    %197 = vset.pattern.permute.xlu0 1
    %198 = vperm.xlu0 %197, %v42
    %v199 = vpop.permute.xlu0 %198
    %201 = vset.pattern.permute.xlu0 1
    %202 = vperm.xlu0 %201, %v43
    %v203 = vpop.permute.xlu0 %202
    %v205 = vperm.slane %v27, 1
    %v206 = vmul.f32 %v143, %v205
    %v207 = vmul.f32 %v147, %v205
    %v208 = vmul.f32 %v151, %v205
    %v209 = vmul.f32 %v155, %v205
    %v210 = vmul.f32 %v159, %v205
    %v211 = vmul.f32 %v163, %v205
    %v212 = vmul.f32 %v167, %v205
    %v213 = vmul.f32 %v171, %v205
    %v214 = vmul.f32 %v175, %v205
    %v215 = vmul.f32 %v179, %v205
    %v216 = vmul.f32 %v183, %v205
    %v217 = vmul.f32 %v187, %v205
    %v218 = vmul.f32 %v191, %v205
    %v219 = vmul.f32 %v195, %v205
    %v220 = vmul.f32 %v199, %v205
    %v221 = vmul.f32 %v203, %v205
    %v222 = vadd.f32 %v125, %v206
    %v223 = vadd.f32 %v126, %v207
    %v224 = vadd.f32 %v127, %v208
    %v225 = vadd.f32 %v128, %v209
    %v226 = vadd.f32 %v129, %v210
    %v227 = vadd.f32 %v130, %v211
    %v228 = vadd.f32 %v131, %v212
    %v229 = vadd.f32 %v132, %v213
    %v230 = vadd.f32 %v133, %v214
    %v231 = vadd.f32 %v134, %v215
    %v232 = vadd.f32 %v135, %v216
    %v233 = vadd.f32 %v136, %v217
    %v234 = vadd.f32 %v137, %v218
    %v235 = vadd.f32 %v138, %v219
    %v236 = vadd.f32 %v139, %v220
    %v237 = vadd.f32 %v140, %v221
    %238 = vset.pattern.permute.xlu0 2
    %239 = vperm.xlu0 %238, %v28
    %v240 = vpop.permute.xlu0 %239
    %242 = vset.pattern.permute.xlu0 2
    %243 = vperm.xlu0 %242, %v29
    %v244 = vpop.permute.xlu0 %243
    %246 = vset.pattern.permute.xlu0 2
    %247 = vperm.xlu0 %246, %v30
    %v248 = vpop.permute.xlu0 %247
    %250 = vset.pattern.permute.xlu0 2
    %251 = vperm.xlu0 %250, %v31
    %v252 = vpop.permute.xlu0 %251
    %254 = vset.pattern.permute.xlu0 2
    %255 = vperm.xlu0 %254, %v32
    %v256 = vpop.permute.xlu0 %255
    %258 = vset.pattern.permute.xlu0 2
    %259 = vperm.xlu0 %258, %v33
    %v260 = vpop.permute.xlu0 %259
    %262 = vset.pattern.permute.xlu0 2
    %263 = vperm.xlu0 %262, %v34
    %v264 = vpop.permute.xlu0 %263
    %266 = vset.pattern.permute.xlu0 2
    %267 = vperm.xlu0 %266, %v35
    %v268 = vpop.permute.xlu0 %267
    %270 = vset.pattern.permute.xlu0 2
    %271 = vperm.xlu0 %270, %v36
    %v272 = vpop.permute.xlu0 %271
    %274 = vset.pattern.permute.xlu0 2
    %275 = vperm.xlu0 %274, %v37
    %v276 = vpop.permute.xlu0 %275
    %278 = vset.pattern.permute.xlu0 2
    %279 = vperm.xlu0 %278, %v38
    %v280 = vpop.permute.xlu0 %279
    %282 = vset.pattern.permute.xlu0 2
    %283 = vperm.xlu0 %282, %v39
    %v284 = vpop.permute.xlu0 %283
    %286 = vset.pattern.permute.xlu0 2
    %287 = vperm.xlu0 %286, %v40
    %v288 = vpop.permute.xlu0 %287
    %290 = vset.pattern.permute.xlu0 2
    %291 = vperm.xlu0 %290, %v41
    %v292 = vpop.permute.xlu0 %291
    %294 = vset.pattern.permute.xlu0 2
    %295 = vperm.xlu0 %294, %v42
    %v296 = vpop.permute.xlu0 %295
    %298 = vset.pattern.permute.xlu0 2
    %299 = vperm.xlu0 %298, %v43
    %v300 = vpop.permute.xlu0 %299
    %v302 = vperm.slane %v27, 2
    %v303 = vmul.f32 %v240, %v302
    %v304 = vmul.f32 %v244, %v302
    %v305 = vmul.f32 %v248, %v302
    %v306 = vmul.f32 %v252, %v302
    %v307 = vmul.f32 %v256, %v302
    %v308 = vmul.f32 %v260, %v302
    %v309 = vmul.f32 %v264, %v302
    %v310 = vmul.f32 %v268, %v302
    %v311 = vmul.f32 %v272, %v302
    %v312 = vmul.f32 %v276, %v302
    %v313 = vmul.f32 %v280, %v302
    %v314 = vmul.f32 %v284, %v302
    %v315 = vmul.f32 %v288, %v302
    %v316 = vmul.f32 %v292, %v302
    %v317 = vmul.f32 %v296, %v302
    %v318 = vmul.f32 %v300, %v302
    %v319 = vadd.f32 %v222, %v303
    %v320 = vadd.f32 %v223, %v304
    %v321 = vadd.f32 %v224, %v305
    %v322 = vadd.f32 %v225, %v306
    %v323 = vadd.f32 %v226, %v307
    %v324 = vadd.f32 %v227, %v308
    %v325 = vadd.f32 %v228, %v309
    %v326 = vadd.f32 %v229, %v310
    %v327 = vadd.f32 %v230, %v311
    %v328 = vadd.f32 %v231, %v312
    %v329 = vadd.f32 %v232, %v313
    %v330 = vadd.f32 %v233, %v314
    %v331 = vadd.f32 %v234, %v315
    %v332 = vadd.f32 %v235, %v316
    %v333 = vadd.f32 %v236, %v317
    %v334 = vadd.f32 %v237, %v318
    %335 = vset.pattern.permute.xlu0 3
    %336 = vperm.xlu0 %335, %v28
    %v337 = vpop.permute.xlu0 %336
    %339 = vset.pattern.permute.xlu0 3
    %340 = vperm.xlu0 %339, %v29
    %v341 = vpop.permute.xlu0 %340
    %343 = vset.pattern.permute.xlu0 3
    %344 = vperm.xlu0 %343, %v30
    %v345 = vpop.permute.xlu0 %344
    %347 = vset.pattern.permute.xlu0 3
    %348 = vperm.xlu0 %347, %v31
    %v349 = vpop.permute.xlu0 %348
    %351 = vset.pattern.permute.xlu0 3
    %352 = vperm.xlu0 %351, %v32
    %v353 = vpop.permute.xlu0 %352
    %355 = vset.pattern.permute.xlu0 3
    %356 = vperm.xlu0 %355, %v33
    %v357 = vpop.permute.xlu0 %356
    %359 = vset.pattern.permute.xlu0 3
    %360 = vperm.xlu0 %359, %v34
    %v361 = vpop.permute.xlu0 %360
    %363 = vset.pattern.permute.xlu0 3
    %364 = vperm.xlu0 %363, %v35
    %v365 = vpop.permute.xlu0 %364
    %367 = vset.pattern.permute.xlu0 3
    %368 = vperm.xlu0 %367, %v36
    %v369 = vpop.permute.xlu0 %368
    %371 = vset.pattern.permute.xlu0 3
    %372 = vperm.xlu0 %371, %v37
    %v373 = vpop.permute.xlu0 %372
    %375 = vset.pattern.permute.xlu0 3
    %376 = vperm.xlu0 %375, %v38
    %v377 = vpop.permute.xlu0 %376
    %379 = vset.pattern.permute.xlu0 3
    %380 = vperm.xlu0 %379, %v39
    %v381 = vpop.permute.xlu0 %380
    %383 = vset.pattern.permute.xlu0 3
    %384 = vperm.xlu0 %383, %v40
    %v385 = vpop.permute.xlu0 %384
    %387 = vset.pattern.permute.xlu0 3
    %388 = vperm.xlu0 %387, %v41
    %v389 = vpop.permute.xlu0 %388
    %391 = vset.pattern.permute.xlu0 3
    %392 = vperm.xlu0 %391, %v42
    %v393 = vpop.permute.xlu0 %392
    %395 = vset.pattern.permute.xlu0 3
    %396 = vperm.xlu0 %395, %v43
    %v397 = vpop.permute.xlu0 %396
    %v399 = vperm.slane %v27, 3
    %v400 = vmul.f32 %v337, %v399
    %v401 = vmul.f32 %v341, %v399
    %v402 = vmul.f32 %v345, %v399
    %v403 = vmul.f32 %v349, %v399
    %v404 = vmul.f32 %v353, %v399
    %v405 = vmul.f32 %v357, %v399
    %v406 = vmul.f32 %v361, %v399
    %v407 = vmul.f32 %v365, %v399
    %v408 = vmul.f32 %v369, %v399
    %v409 = vmul.f32 %v373, %v399
    %v410 = vmul.f32 %v377, %v399
    %v411 = vmul.f32 %v381, %v399
    %v412 = vmul.f32 %v385, %v399
    %v413 = vmul.f32 %v389, %v399
    %v414 = vmul.f32 %v393, %v399
    %v415 = vmul.f32 %v397, %v399
    %v416 = vadd.f32 %v319, %v400
    %v417 = vadd.f32 %v320, %v401
    %v418 = vadd.f32 %v321, %v402
    %v419 = vadd.f32 %v322, %v403
    %v420 = vadd.f32 %v323, %v404
    %v421 = vadd.f32 %v324, %v405
    %v422 = vadd.f32 %v325, %v406
    %v423 = vadd.f32 %v326, %v407
    %v424 = vadd.f32 %v327, %v408
    %v425 = vadd.f32 %v328, %v409
    %v426 = vadd.f32 %v329, %v410
    %v427 = vadd.f32 %v330, %v411
    %v428 = vadd.f32 %v331, %v412
    %v429 = vadd.f32 %v332, %v413
    %v430 = vadd.f32 %v333, %v414
    %v431 = vadd.f32 %v334, %v415
    %v432 = vld [vmem:[%s2] sm:$0xff]
    %v433 = vld [vmem:[%s2 + $0x8] sm:$0xff]
    %v434 = vld [vmem:[%s2 + $0x10] sm:$0xff]
    %v435 = vld [vmem:[%s2 + $0x18] sm:$0xff]
    %v436 = vld [vmem:[%s2 + $0x20] sm:$0xff]
    %v437 = vld [vmem:[%s2 + $0x28] sm:$0xff]
    %v438 = vld [vmem:[%s2 + $0x30] sm:$0xff]
    %v439 = vld [vmem:[%s2 + $0x38] sm:$0xff]
    %v440 = vld [vmem:[%s2 + $0x40] sm:$0xff]
    %v441 = vld [vmem:[%s2 + $0x48] sm:$0xff]
    %v442 = vld [vmem:[%s2 + $0x50] sm:$0xff]
    %v443 = vld [vmem:[%s2 + $0x58] sm:$0xff]
    %v444 = vld [vmem:[%s2 + $0x60] sm:$0xff]
    %v445 = vld [vmem:[%s2 + $0x68] sm:$0xff]
    %v446 = vld [vmem:[%s2 + $0x70] sm:$0xff]
    %v447 = vld [vmem:[%s2 + $0x78] sm:$0xff]
    %449 = vset.pattern.permute.xlu0 0
    %450 = vperm.xlu0 %449, %v432
    %v451 = vpop.permute.xlu0 %450
    %454 = vset.pattern.permute.xlu0 0
    %455 = vperm.xlu0 %454, %v433
    %v456 = vpop.permute.xlu0 %455
    %459 = vset.pattern.permute.xlu0 0
    %460 = vperm.xlu0 %459, %v434
    %v461 = vpop.permute.xlu0 %460
    %464 = vset.pattern.permute.xlu0 0
    %465 = vperm.xlu0 %464, %v435
    %v466 = vpop.permute.xlu0 %465
    %469 = vset.pattern.permute.xlu0 0
    %470 = vperm.xlu0 %469, %v436
    %v471 = vpop.permute.xlu0 %470
    %474 = vset.pattern.permute.xlu0 0
    %475 = vperm.xlu0 %474, %v437
    %v476 = vpop.permute.xlu0 %475
    %479 = vset.pattern.permute.xlu0 0
    %480 = vperm.xlu0 %479, %v438
    %v481 = vpop.permute.xlu0 %480
    %484 = vset.pattern.permute.xlu0 0
    %485 = vperm.xlu0 %484, %v439
    %v486 = vpop.permute.xlu0 %485
    %489 = vset.pattern.permute.xlu0 0
    %490 = vperm.xlu0 %489, %v440
    %v491 = vpop.permute.xlu0 %490
    %494 = vset.pattern.permute.xlu0 0
    %495 = vperm.xlu0 %494, %v441
    %v496 = vpop.permute.xlu0 %495
    %499 = vset.pattern.permute.xlu0 0
    %500 = vperm.xlu0 %499, %v442
    %v501 = vpop.permute.xlu0 %500
    %504 = vset.pattern.permute.xlu0 0
    %505 = vperm.xlu0 %504, %v443
    %v506 = vpop.permute.xlu0 %505
    %509 = vset.pattern.permute.xlu0 0
    %510 = vperm.xlu0 %509, %v444
    %v511 = vpop.permute.xlu0 %510
    %514 = vset.pattern.permute.xlu0 0
    %515 = vperm.xlu0 %514, %v445
    %v516 = vpop.permute.xlu0 %515
    %519 = vset.pattern.permute.xlu0 0
    %520 = vperm.xlu0 %519, %v446
    %v521 = vpop.permute.xlu0 %520
    %524 = vset.pattern.permute.xlu0 0
    %525 = vperm.xlu0 %524, %v447
    %v526 = vpop.permute.xlu0 %525
    %v528 = vadd.f32 %v416, %v451
    %v529 = vadd.f32 %v417, %v456
    %v530 = vadd.f32 %v418, %v461
    %v531 = vadd.f32 %v419, %v466
    %v532 = vadd.f32 %v420, %v471
    %v533 = vadd.f32 %v421, %v476
    %v534 = vadd.f32 %v422, %v481
    %v535 = vadd.f32 %v423, %v486
    %v536 = vadd.f32 %v424, %v491
    %v537 = vadd.f32 %v425, %v496
    %v538 = vadd.f32 %v426, %v501
    %v539 = vadd.f32 %v427, %v506
    %v540 = vadd.f32 %v428, %v511
    %v541 = vadd.f32 %v429, %v516
    %v542 = vadd.f32 %v430, %v521
    %v543 = vadd.f32 %v431, %v526
    %v544 = vmax.f32 %v528, 0.0
    %v545 = vmax.f32 %v529, 0.0
    %v546 = vmax.f32 %v530, 0.0
    %v547 = vmax.f32 %v531, 0.0
    %v548 = vmax.f32 %v532, 0.0
    %v549 = vmax.f32 %v533, 0.0
    %v550 = vmax.f32 %v534, 0.0
    %v551 = vmax.f32 %v535, 0.0
    %v552 = vmax.f32 %v536, 0.0
    %v553 = vmax.f32 %v537, 0.0
    %v554 = vmax.f32 %v538, 0.0
    %v555 = vmax.f32 %v539, 0.0
    %v556 = vmax.f32 %v540, 0.0
    %v557 = vmax.f32 %v541, 0.0
    %v558 = vmax.f32 %v542, 0.0
    %v559 = vmax.f32 %v543, 0.0
    %v560 = vld [vmem:[%s3] sm:$0xf]
    %v561 = vld [vmem:[%s3 + $0x4] sm:$0xf]
    %v562 = vld [vmem:[%s3 + $0x8] sm:$0xf]
    %v563 = vld [vmem:[%s3 + $0xc] sm:$0xf]
    %v564 = vld [vmem:[%s3 + $0x10] sm:$0xf]
    %v565 = vld [vmem:[%s3 + $0x14] sm:$0xf]
    %v566 = vld [vmem:[%s3 + $0x18] sm:$0xf]
    %v567 = vld [vmem:[%s3 + $0x1c] sm:$0xf]
    %v568 = vld [vmem:[%s3 + $0x20] sm:$0xf]
    %v569 = vld [vmem:[%s3 + $0x24] sm:$0xf]
    %v570 = vld [vmem:[%s3 + $0x28] sm:$0xf]
    %v571 = vld [vmem:[%s3 + $0x2c] sm:$0xf]
    %v572 = vld [vmem:[%s3 + $0x30] sm:$0xf]
    %v573 = vld [vmem:[%s3 + $0x34] sm:$0xf]
    %v574 = vld [vmem:[%s3 + $0x38] sm:$0xf]
    %v575 = vld [vmem:[%s3 + $0x3c] sm:$0xf]
    %v576 = vpack.c.bf16 %v545, %v544
    %v577 = vpack.c.bf16 %v547, %v546
    %v578 = vpack.c.bf16 %v549, %v548
    %v579 = vpack.c.bf16 %v551, %v550
    %v580 = vpack.c.bf16 %v553, %v552
    %v581 = vpack.c.bf16 %v555, %v554
    %v582 = vpack.c.bf16 %v557, %v556
    %v583 = vpack.c.bf16 %v559, %v558
    %v584 = vld [vmem:[%s4] sm:$0xff]
    %v585 = vld [vmem:[%s4 + $0x8] sm:$0xff]
    %v586 = vld [vmem:[%s4 + $0x10] sm:$0xff]
    %v587 = vld [vmem:[%s4 + $0x18] sm:$0xff]
    %v588 = vld [vmem:[%s4 + $0x20] sm:$0xff]
    %v589 = vld [vmem:[%s4 + $0x28] sm:$0xff]
    %v590 = vld [vmem:[%s4 + $0x30] sm:$0xff]
    %v591 = vld [vmem:[%s4 + $0x38] sm:$0xff]
    %v592 = vld [vmem:[%s4 + $0x40] sm:$0xff]
    %v593 = vld [vmem:[%s4 + $0x48] sm:$0xff]
    %v594 = vld [vmem:[%s4 + $0x50] sm:$0xff]
    %v595 = vld [vmem:[%s4 + $0x58] sm:$0xff]
    %v596 = vld [vmem:[%s4 + $0x60] sm:$0xff]
    %v597 = vld [vmem:[%s4 + $0x68] sm:$0xff]
    %v598 = vld [vmem:[%s4 + $0x70] sm:$0xff]
    %v599 = vld [vmem:[%s4 + $0x78] sm:$0xff]
    %601 = vset.pattern.permute.xlu0 0
    %602 = vperm.xlu0 %601, %v584
    %v603 = vpop.permute.xlu0 %602
    %606 = vset.pattern.permute.xlu0 0
    %607 = vperm.xlu0 %606, %v585
    %v608 = vpop.permute.xlu0 %607
    %611 = vset.pattern.permute.xlu0 0
    %612 = vperm.xlu0 %611, %v586
    %v613 = vpop.permute.xlu0 %612
    %616 = vset.pattern.permute.xlu0 0
    %617 = vperm.xlu0 %616, %v587
    %v618 = vpop.permute.xlu0 %617
    %621 = vset.pattern.permute.xlu0 0
    %622 = vperm.xlu0 %621, %v588
    %v623 = vpop.permute.xlu0 %622
    %626 = vset.pattern.permute.xlu0 0
    %627 = vperm.xlu0 %626, %v589
    %v628 = vpop.permute.xlu0 %627
    %631 = vset.pattern.permute.xlu0 0
    %632 = vperm.xlu0 %631, %v590
    %v633 = vpop.permute.xlu0 %632
    %636 = vset.pattern.permute.xlu0 0
    %637 = vperm.xlu0 %636, %v591
    %v638 = vpop.permute.xlu0 %637
    %641 = vset.pattern.permute.xlu0 0
    %642 = vperm.xlu0 %641, %v592
    %v643 = vpop.permute.xlu0 %642
    %646 = vset.pattern.permute.xlu0 0
    %647 = vperm.xlu0 %646, %v593
    %v648 = vpop.permute.xlu0 %647
    %651 = vset.pattern.permute.xlu0 0
    %652 = vperm.xlu0 %651, %v594
    %v653 = vpop.permute.xlu0 %652
    %656 = vset.pattern.permute.xlu0 0
    %657 = vperm.xlu0 %656, %v595
    %v658 = vpop.permute.xlu0 %657
    %661 = vset.pattern.permute.xlu0 0
    %662 = vperm.xlu0 %661, %v596
    %v663 = vpop.permute.xlu0 %662
    %666 = vset.pattern.permute.xlu0 0
    %667 = vperm.xlu0 %666, %v597
    %v668 = vpop.permute.xlu0 %667
    %671 = vset.pattern.permute.xlu0 0
    %672 = vperm.xlu0 %671, %v598
    %v673 = vpop.permute.xlu0 %672
    %676 = vset.pattern.permute.xlu0 0
    %677 = vperm.xlu0 %676, %v599
    %v678 = vpop.permute.xlu0 %677
    %v696 = vunpack.c.l.b16 %v560
    %v697 = vunpack.c.l.b16 %v561
    %v698 = vunpack.c.l.b16 %v562
    %v699 = vunpack.c.l.b16 %v563
    %v700 = vunpack.c.l.b16 %v564
    %v701 = vunpack.c.l.b16 %v565
    %v702 = vunpack.c.l.b16 %v566
    %v703 = vunpack.c.l.b16 %v567
    %v704 = vunpack.c.l.b16 %v568
    %v705 = vunpack.c.l.b16 %v569
    %v706 = vunpack.c.l.b16 %v570
    %v707 = vunpack.c.l.b16 %v571
    %v708 = vunpack.c.l.b16 %v572
    %v709 = vunpack.c.l.b16 %v573
    %v710 = vunpack.c.l.b16 %v574
    %v711 = vunpack.c.l.b16 %v575
    %v712 = vpack.c.b16 %v697, %v696
    %v713 = vpack.c.b16 %v699, %v698
    %v714 = vpack.c.b16 %v701, %v700
    %v715 = vpack.c.b16 %v703, %v702
    %v716 = vpack.c.b16 %v705, %v704
    %v717 = vpack.c.b16 %v707, %v706
    %v718 = vpack.c.b16 %v709, %v708
    %v719 = vpack.c.b16 %v711, %v710
    %728 = vmatpush.bf16.msra.mxu0 %v583
    %729 = vmatpush.bf16.msra.mxu0 %v582
    %730 = vmatpush.bf16.msra.mxu0 %v581
    %731 = vmatpush.bf16.msra.mxu0 %v580
    %732 = vmatpush.bf16.msra.mxu0 %v579
    %733 = vmatpush.bf16.msra.mxu0 %v578
    %734 = vmatpush.bf16.msra.mxu0 %v577
    %735 = vmatpush.bf16.msra.mxu0 %v576
    %736 = vmatmul.bf16.gmra.mxu0 %v712
    %v737 = vpop.f32.mrf.mxu0
    %v738 = vadd.f32 %v603, %v737
    %v739 = vpop.f32.mrf.mxu0
    %v740 = vadd.f32 %v608, %v739
    %741 = vmatmul.bf16.gmra.mxu0 %v713
    %v742 = vpop.f32.mrf.mxu0
    %v743 = vadd.f32 %v613, %v742
    %v744 = vpop.f32.mrf.mxu0
    %v745 = vadd.f32 %v618, %v744
    %746 = vmatmul.bf16.gmra.mxu0 %v714
    %v747 = vpop.f32.mrf.mxu0
    %v748 = vadd.f32 %v623, %v747
    %v749 = vpop.f32.mrf.mxu0
    %v750 = vadd.f32 %v628, %v749
    %751 = vmatmul.bf16.gmra.mxu0 %v715
    %v752 = vpop.f32.mrf.mxu0
    %v753 = vadd.f32 %v633, %v752
    %v754 = vpop.f32.mrf.mxu0
    %v755 = vadd.f32 %v638, %v754
    %756 = vmatmul.bf16.gmra.mxu0 %v716
    %v757 = vpop.f32.mrf.mxu0
    %v758 = vadd.f32 %v643, %v757
    %v759 = vpop.f32.mrf.mxu0
    %v760 = vadd.f32 %v648, %v759
    %761 = vmatmul.bf16.gmra.mxu0 %v717
    %v762 = vpop.f32.mrf.mxu0
    %v763 = vadd.f32 %v653, %v762
    %v764 = vpop.f32.mrf.mxu0
    %v765 = vadd.f32 %v658, %v764
    %766 = vmatmul.bf16.gmra.mxu0 %v718
    %v767 = vpop.f32.mrf.mxu0
    %v768 = vadd.f32 %v663, %v767
    %v769 = vpop.f32.mrf.mxu0
    %v770 = vadd.f32 %v668, %v769
    %771 = vmatmul.bf16.gmra.mxu0 %v719
    %v772 = vpop.f32.mrf.mxu0
    %v773 = vadd.f32 %v673, %v772
    %v774 = vpop.f32.mrf.mxu0
    %v775 = vadd.f32 %v678, %v774
    %776 = vdwg.mxu0
    %v777 = vmax.f32 %v738, 0.0
    %v778 = vmax.f32 %v740, 0.0
    %v779 = vmax.f32 %v743, 0.0
    %v780 = vmax.f32 %v745, 0.0
    %v781 = vmax.f32 %v748, 0.0
    %v782 = vmax.f32 %v750, 0.0
    %v783 = vmax.f32 %v753, 0.0
    %v784 = vmax.f32 %v755, 0.0
    %v785 = vmax.f32 %v758, 0.0
    %v786 = vmax.f32 %v760, 0.0
    %v787 = vmax.f32 %v763, 0.0
    %v788 = vmax.f32 %v765, 0.0
    %v789 = vmax.f32 %v768, 0.0
    %v790 = vmax.f32 %v770, 0.0
    %v791 = vmax.f32 %v773, 0.0
    %v792 = vmax.f32 %v775, 0.0
    %v793 = vld [vmem:[%s5] sm:$0xf]
    %v794 = vpack.c.bf16 %v778, %v777
    %v795 = vpack.c.bf16 %v780, %v779
    %v796 = vpack.c.bf16 %v782, %v781
    %v797 = vpack.c.bf16 %v784, %v783
    %v798 = vpack.c.bf16 %v786, %v785
    %v799 = vpack.c.bf16 %v788, %v787
    %v800 = vpack.c.bf16 %v790, %v789
    %v801 = vpack.c.bf16 %v792, %v791
    %v802 = vld [vmem:[%s6] sm:$0xff]
    %804 = vset.pattern.permute.xlu0 0
    %805 = vperm.xlu0 %804, %v802
    %v806 = vpop.permute.xlu0 %805
    %808 = vmatpush.bf16.msra.mxu0 %v801
    %809 = vmatpush.bf16.msra.mxu0 %v800
    %810 = vmatpush.bf16.msra.mxu0 %v799
    %811 = vmatpush.bf16.msra.mxu0 %v798
    %812 = vmatpush.bf16.msra.mxu0 %v797
    %813 = vmatpush.bf16.msra.mxu0 %v796
    %814 = vmatpush.bf16.msra.mxu0 %v795
    %815 = vmatpush.bf16.msra.mxu0 %v794
    %816 = vmatmul.bf16.gmra.mxu0 %v793
    %v817 = vpop.f32.mrf.mxu0
    %v818 = vadd.f32 %v806, %v817
    %v819 = vpop.f32.mrf.mxu0
    %820 = vdwg.mxu0
    %821 = vst [vmem:[#allocation2] sm:$0xff] %v818
    // Predicated region
    $region30: #{tpu_custom_call.1} parent=1 // pred_check
      _
    $region31: #{tpu_custom_call.1} parent=1 // pred_check_branch
      %823 = sbr.rel (0) target = $region33
    $region32: #{tpu_custom_call.1} parent=1 // pred_region
      %825 = vsyncadd [#allocation3], 0
      %s827 = sshll.u32 [#allocation2], 4
      %s828 = int_to_ptr.vmem [resolvable:$true] %s827
      %s829 = sshll.u32 %s7, 4
      %s830 = int_to_ptr.hbm [resolvable:$true] %s829
      %832 = dma.vmem_to_hbm [thread:$0]  %s828, 128, %s830, [#allocation3]
    $region33: #{tpu_custom_call.1} parent=1 // pred_fallthru
      _
    // Predicated region
    $region34: #{tpu_custom_call.1} parent=1 // pred_check
      _
    $region35: #{tpu_custom_call.1} parent=1 // pred_check_branch
      %834 = sbr.rel (0) target = $region37
    $region36: #{tpu_custom_call.1} parent=1 // pred_region
      %836 = dma.done [#allocation3], 128
    $region37: #{tpu_custom_call.1} parent=1 // pred_fallthru
      _
    %837 = vsyncpa [#allocation3], 1

</llo_original>
